<compile_context>
chip_gen: v6e
topology: v6e:2x2x1
jax: 0.10.0
libtpu: 0.0.40
codegen_flags: <defaults>
</compile_context>

<pallas_src>
import jax
import jax.numpy as jnp
from jax.experimental import pallas as pl
from jax.experimental.pallas import tpu as pltpu


# ----------------------------------------------------------------------------
# Kernels (batch on the 128-lane axis; features 4/16/2 on sublanes)
# ----------------------------------------------------------------------------
def _policy_kernel_2act(x_ref, w1_ref, b1_ref, w2_ref, b2_ref, w3d_ref, b3d_ref,
                        out_ref):
    # x_ref: (obs_dim, tb).  Matmul operands in bf16 (MXU-native everywhere),
    # accumulation + biases + activations in f32.
    x = x_ref[...].astype(jnp.bfloat16)

    # fc1 + tanh : (16, obs_dim) @ (obs_dim, tb) -> (16, tb)
    h1 = jnp.tanh(
        jnp.dot(w1_ref[...], x, preferred_element_type=jnp.float32) + b1_ref[...]
    )
    # fc2 + tanh : (16, 16) @ (16, tb) -> (16, tb)
    # NOTE: tanh is the single-EUP-slot hot spot at large tiles; bf16 tanh
    # (v6e/v7x) or a VPU polynomial (v5e) are the next optimizations if the
    # bundle dump shows EUP-bound.
    h2 = jnp.tanh(
        jnp.dot(w2_ref[...], h1.astype(jnp.bfloat16),
                preferred_element_type=jnp.float32) + b2_ref[...]
    )

    # fc3 folded to one logit-difference row:
    #   d = (w3[1]-w3[0]) @ h2 + (b3[1]-b3[0])          -> (1, tb)
    d = (
        jnp.dot(w3d_ref[...], h2.astype(jnp.bfloat16),
                preferred_element_type=jnp.float32) + b3d_ref[...]
    )
    # 2-class softmax == sigmoid(d).  Clamp so exp never overflows; sigmoid(+-30)
    # is already 0/1 at f32 precision.
    d = jnp.clip(d, -30.0, 30.0)
    p1 = pl.reciprocal(1.0 + jnp.exp(-d), approx=True)   # EUP slot, ~free

    # Direct row writes (no concatenate); rows sum to exactly 1 by construction.
    out_ref[0:1, :] = (1.0 - p1).astype(out_ref.dtype)
    out_ref[1:2, :] = p1.astype(out_ref.dtype)


def _policy_kernel_nact(x_ref, w1_ref, b1_ref, w2_ref, b2_ref, w3_ref, b3_ref,
                        out_ref):
    # General num_actions path: softmax over the (sublane) action axis only —
    # never across batch lanes, so padded lanes of a partial block stay inert.
    x = x_ref[...].astype(jnp.bfloat16)
    h1 = jnp.tanh(
        jnp.dot(w1_ref[...], x, preferred_element_type=jnp.float32) + b1_ref[...]
    )
    h2 = jnp.tanh(
        jnp.dot(w2_ref[...], h1.astype(jnp.bfloat16),
                preferred_element_type=jnp.float32) + b2_ref[...]
    )
    logits = (
        jnp.dot(w3_ref[...], h2.astype(jnp.bfloat16),
                preferred_element_type=jnp.float32) + b3_ref[...]
    )
    m = jnp.max(logits, axis=0, keepdims=True)
    e = jnp.exp(logits - m)
    out_ref[...] = (e / jnp.sum(e, axis=0, keepdims=True)).astype(out_ref.dtype)


# ----------------------------------------------------------------------------
# Wrappers
# ----------------------------------------------------------------------------
def _round_up(n, m):
    return ((n + m - 1) // m) * m


def _pick_batch_tile(batch, requested):
    """Lane-aligned batch tile; large enough to amortize ~0.35 us/step overhead,
    small enough to fit default scoped VMEM on all generations, and split into
    >= 2 grid steps so v7x's two TensorCores both get work."""
    tb = max(128, min(int(requested), _round_up(batch, 128)))
    tb = _round_up(tb, 128)
    # v7x: prefer >= 2 "parallel" grid steps over one giant tile.
    tb = min(tb, max(128, _round_up(pl.cdiv(batch, 2), 128)))
    return tb


def policy_nn_forward_batch_last(x_t, params, *, batch_tile=16384):
    """Recommended production path (zero HBM relayouts).

    x_t: (obs_dim, B), float32 or bfloat16 (bf16 cuts input HBM traffic ~2x at
    identical kernel numerics).  Returns softmax probabilities (num_actions, B)
    in float32.  Parameters are in PyTorch layout: W (out, in), b (out,) or (out, 1).
    """
    w1, b1, w2, b2, w3, b3 = params
    obs_dim, batch = x_t.shape
    num_actions = w3.shape[0]

    b1 = jnp.reshape(b1, (-1, 1)).astype(jnp.float32)
    b2 = jnp.reshape(b2, (-1, 1)).astype(jnp.float32)
    b3 = jnp.reshape(b3, (-1, 1)).astype(jnp.float32)
    w1b = w1.astype(jnp.bfloat16)
    w2b = w2.astype(jnp.bfloat16)

    if num_actions == 2:
        kernel = _policy_kernel_2act
        w3_in = (w3[1:2, :] - w3[0:1, :]).astype(jnp.bfloat16)   # (1, 16)
        b3_in = b3[1:2, :] - b3[0:1, :]                          # (1, 1)
    else:
        kernel = _policy_kernel_nact
        w3_in = w3.astype(jnp.bfloat16)
        b3_in = b3

    tb = _pick_batch_tile(batch, batch_tile)
    # Non-divisible batches -> padded last block; out-of-bounds output lanes are
    # masked on writeback, so no jnp.pad copy of x is needed.
    grid = (pl.cdiv(batch, tb),)

    grid_spec = pltpu.PrefetchScalarGridSpec(
        num_scalar_prefetch=0,
        grid=grid,
        in_specs=[
            # Streamed input: lane-dense (obs_dim, tb) blocks along the batch axis.
            pl.BlockSpec((obs_dim, tb), lambda i: (0, i)),
            # Tiny parameters: VMEM-resident (same block every grid step).
            pl.BlockSpec(w1b.shape, lambda i: (0, 0)),
            pl.BlockSpec(b1.shape, lambda i: (0, 0)),
            pl.BlockSpec(w2b.shape, lambda i: (0, 0)),
            pl.BlockSpec(b2.shape, lambda i: (0, 0)),
            pl.BlockSpec(w3_in.shape, lambda i: (0, 0)),
            pl.BlockSpec(b3_in.shape, lambda i: (0, 0)),
        ],
        # Lane-dense output: last dim is the 128-multiple batch tile.
        out_specs=pl.BlockSpec((num_actions, tb), lambda i: (0, i)),
    )

    return pl.pallas_call(
        kernel,
        out_shape=jax.ShapeDtypeStruct((num_actions, batch), jnp.float32),
        grid_spec=grid_spec,
        compiler_params=pltpu.CompilerParams(
            # Independent batch tiles: lets v7x shard grid steps across its 2 TCs.
            dimension_semantics=("parallel",),
        ),
    )(x_t, w1b, b1, w2b, b2, w3_in, b3_in)


def policy_nn_forward(x, params, *, batch_tile=16384):
    """PyTorch-layout compatibility path: x (B, obs_dim) -> probs (B, num_actions).

    NOTE: this adds two XLA layout passes (x.T on the way in, out.T on the way
    out) on top of the kernel's minimal HBM traffic.  For throughput-critical
    use, have the producer emit batch-last observations and call
    policy_nn_forward_batch_last directly.
    """
    out_t = policy_nn_forward_batch_last(x.T, params, batch_tile=batch_tile)
    return out_t.T


# ----------------------------------------------------------------------------
# Reference + init (PyTorch nn.Linear semantics)
# ----------------------------------------------------------------------------
def init_params(key, obs_dim=4, num_actions=2):
    """PyTorch nn.Linear-style init; W stored (out, in), b (out, 1)."""
    def linear(k, fan_in, fan_out):
        kw, kb = jax.random.split(k)
        bound = 1.0 / jnp.sqrt(float(fan_in))
        w = jax.random.uniform(kw, (fan_out, fan_in), jnp.float32, -bound, bound)
        b = jax.random.uniform(kb, (fan_out, 1), jnp.float32, -bound, bound)
        return w, b

    k1, k2, k3 = jax.random.split(key, 3)
    w1, b1 = linear(k1, obs_dim, 16)
    w2, b2 = linear(k2, 16, 16)
    w3, b3 = linear(k3, 16, num_actions)
    return (w1, b1, w2, b2, w3, b3)


def reference_forward(x, params):
    w1, b1, w2, b2, w3, b3 = params
    h1 = jnp.tanh(x @ w1.T + b1[:, 0])
    h2 = jnp.tanh(h1 @ w2.T + b2[:, 0])
    logits = h2 @ w3.T + b3[:, 0]
    return jax.nn.softmax(logits, axis=-1)


if __name__ == "__main__":
    key = jax.random.PRNGKey(0)
    k_params, k_x = jax.random.split(key)

    obs_dim, num_actions = 4, 2
    params = init_params(k_params, obs_dim=obs_dim, num_actions=num_actions)

    # Small demo shapes: 1024 rows -> tb=512 and two "parallel" grid steps (keeps
    # both v7x TensorCores busy); production-sized batches get 16K-row tiles.
    batch = 1024
    x = jax.random.normal(k_x, (batch, obs_dim), dtype=jnp.float32)
    ref = reference_forward(x, params)

    # Tolerance: bf16 MXU operands + approx-EUP reciprocal vs. the f32 reference.
    TOL = 2e-2

    # (a) Recommended batch-last path.  (The x.T here only builds the demo input;
    #     a real producer would emit the (obs_dim, B) layout directly.)
    out_t = jax.block_until_ready(policy_nn_forward_batch_last(x.T, params))
    assert out_t.shape == (num_actions, batch)
    assert float(jnp.max(jnp.abs(out_t.T - ref))) < TOL
    # Rows sum to exactly 1 by construction (p0 = 1 - p1).
    assert float(jnp.max(jnp.abs(jnp.sum(out_t, axis=0) - 1.0))) < 1e-5

    # (b) Drop-in PyTorch-layout path.
    out = jax.block_until_ready(policy_nn_forward(x, params))
    assert out.shape == (batch, num_actions)
    assert float(jnp.max(jnp.abs(out - ref))) < TOL
    assert float(jnp.max(jnp.abs(jnp.sum(out, axis=-1) - 1.0))) < 1e-5

    # (c) Ragged batch exercises the masked partial last block (no padding copy).
    x_small = jax.random.normal(jax.random.PRNGKey(1), (100, obs_dim),
                                dtype=jnp.float32)
    out_small = jax.block_until_ready(policy_nn_forward(x_small, params))
    ref_small = reference_forward(x_small, params)
    assert out_small.shape == (100, num_actions)
    assert float(jnp.max(jnp.abs(out_small - ref_small))) < TOL

    print("KERNEL_OK")
</pallas_src>

<mosaic_0001>
module attributes {stable_mosaic.version = 11 : i64} {
  func.func @_policy_kernel_2act(%arg0: i32, %arg1: memref<4x512xf32, #tpu.memory_space<vmem>>, %arg2: memref<16x4xbf16, #tpu.memory_space<vmem>>, %arg3: memref<16x1xf32, #tpu.memory_space<vmem>>, %arg4: memref<16x16xbf16, #tpu.memory_space<vmem>>, %arg5: memref<16x1xf32, #tpu.memory_space<vmem>>, %arg6: memref<1x16xbf16, #tpu.memory_space<vmem>>, %arg7: memref<1x1xf32, #tpu.memory_space<vmem>>, %arg8: memref<2x512xf32, #tpu.memory_space<vmem>>) attributes {dimension_semantics = [#tpu.dimension_semantics<parallel>], iteration_bounds = array<i64: 2>, scalar_prefetch = 0 : i64, scratch_operands = 0 : i64, tpu.core_type = #tpu.core_type<tc>, window_params = [{transform_indices = @transform_0, window_bounds = array<i64: 4, 512>}, {pipeline_mode = #tpu.pipeline_mode<synchronous>, transform_indices = @transform_1, window_bounds = array<i64: 16, 4>}, {pipeline_mode = #tpu.pipeline_mode<synchronous>, transform_indices = @transform_2, window_bounds = array<i64: 16, 1>}, {pipeline_mode = #tpu.pipeline_mode<synchronous>, transform_indices = @transform_3, window_bounds = array<i64: 16, 16>}, {pipeline_mode = #tpu.pipeline_mode<synchronous>, transform_indices = @transform_4, window_bounds = array<i64: 16, 1>}, {pipeline_mode = #tpu.pipeline_mode<synchronous>, transform_indices = @transform_5, window_bounds = array<i64: 1, 16>}, {pipeline_mode = #tpu.pipeline_mode<synchronous>, transform_indices = @transform_6, window_bounds = array<i64: 1, 1>}, {transform_indices = @transform_7, window_bounds = array<i64: 2, 512>}]} {
    %c0 = arith.constant 0 : index
    %c0_0 = arith.constant 0 : index
    %0 = vector.load %arg1[%c0, %c0_0] : memref<4x512xf32, #tpu.memory_space<vmem>>, vector<4x512xf32>
    %1 = arith.truncf %0 : vector<4x512xf32> to vector<4x512xbf16>
    %c0_1 = arith.constant 0 : index
    %c0_2 = arith.constant 0 : index
    %2 = vector.load %arg2[%c0_1, %c0_2] : memref<16x4xbf16, #tpu.memory_space<vmem>>, vector<16x4xbf16>
    %cst = arith.constant dense<0.000000e+00> : vector<16x512xf32>
    %3 = tpu.matmul %2, %1, %cst {dimension_numbers = #tpu.dot_dimension_numbers<[1], [0], [0], [1], [0, 0, 1, 1], [], []>} : vector<16x4xbf16>, vector<4x512xbf16>, vector<16x512xf32> -> vector<16x512xf32>
    %c0_3 = arith.constant 0 : index
    %c0_4 = arith.constant 0 : index
    %4 = vector.load %arg3[%c0_3, %c0_4] : memref<16x1xf32, #tpu.memory_space<vmem>>, vector<16x1xf32>
    %5 = vector.broadcast %4 : vector<16x1xf32> to vector<16x512xf32>
    %6 = arith.addf %3, %5 : vector<16x512xf32>
    %7 = math.tanh %6 : vector<16x512xf32>
    %c0_5 = arith.constant 0 : index
    %c0_6 = arith.constant 0 : index
    %8 = vector.load %arg4[%c0_5, %c0_6] : memref<16x16xbf16, #tpu.memory_space<vmem>>, vector<16x16xbf16>
    %9 = arith.truncf %7 : vector<16x512xf32> to vector<16x512xbf16>
    %cst_7 = arith.constant dense<0.000000e+00> : vector<16x512xf32>
    %10 = tpu.matmul %8, %9, %cst_7 {dimension_numbers = #tpu.dot_dimension_numbers<[1], [0], [0], [1], [0, 0, 1, 1], [], []>} : vector<16x16xbf16>, vector<16x512xbf16>, vector<16x512xf32> -> vector<16x512xf32>
    %c0_8 = arith.constant 0 : index
    %c0_9 = arith.constant 0 : index
    %11 = vector.load %arg5[%c0_8, %c0_9] : memref<16x1xf32, #tpu.memory_space<vmem>>, vector<16x1xf32>
    %12 = vector.broadcast %11 : vector<16x1xf32> to vector<16x512xf32>
    %13 = arith.addf %10, %12 : vector<16x512xf32>
    %14 = math.tanh %13 : vector<16x512xf32>
    %c0_10 = arith.constant 0 : index
    %c0_11 = arith.constant 0 : index
    %15 = vector.load %arg6[%c0_10, %c0_11] : memref<1x16xbf16, #tpu.memory_space<vmem>>, vector<1x16xbf16>
    %16 = arith.truncf %14 : vector<16x512xf32> to vector<16x512xbf16>
    %cst_12 = arith.constant dense<0.000000e+00> : vector<1x512xf32>
    %17 = tpu.matmul %15, %16, %cst_12 {dimension_numbers = #tpu.dot_dimension_numbers<[1], [0], [0], [1], [0, 0, 1, 1], [], []>} : vector<1x16xbf16>, vector<16x512xbf16>, vector<1x512xf32> -> vector<1x512xf32>
    %c0_13 = arith.constant 0 : index
    %c0_14 = arith.constant 0 : index
    %18 = vector.load %arg7[%c0_13, %c0_14] : memref<1x1xf32, #tpu.memory_space<vmem>>, vector<1x1xf32>
    %19 = vector.broadcast %18 : vector<1x1xf32> to vector<1x512xf32>
    %20 = arith.addf %17, %19 : vector<1x512xf32>
    %cst_15 = arith.constant -3.000000e+01 : f32
    %cst_16 = arith.constant 3.000000e+01 : f32
    %21 = vector.broadcast %cst_15 : f32 to vector<1x512xf32>
    %22 = arith.maximumf %21, %20 : vector<1x512xf32>
    %23 = vector.broadcast %cst_16 : f32 to vector<1x512xf32>
    %24 = arith.minimumf %23, %22 : vector<1x512xf32>
    %cst_17 = arith.constant 0.000000e+00 : f32
    %25 = vector.broadcast %cst_17 : f32 to vector<1x512xf32>
    %26 = arith.subf %25, %24 : vector<1x512xf32>
    %27 = math.exp %26 : vector<1x512xf32>
    %cst_18 = arith.constant 1.000000e+00 : f32
    %28 = vector.broadcast %cst_18 : f32 to vector<1x512xf32>
    %29 = arith.addf %28, %27 : vector<1x512xf32>
    %30 = tpu.reciprocal %29 {approx = true} : vector<1x512xf32> -> vector<1x512xf32>
    %cst_19 = arith.constant 1.000000e+00 : f32
    %31 = vector.broadcast %cst_19 : f32 to vector<1x512xf32>
    %32 = arith.subf %31, %30 : vector<1x512xf32>
    %c0_20 = arith.constant 0 : index
    %c0_21 = arith.constant 0 : index
    %33 = vector.load %arg8[%c0_20, %c0_21] : memref<2x512xf32, #tpu.memory_space<vmem>>, vector<1x512xf32>
    tpu.vector_store %arg8[%c0_20, %c0_21], %32 {strides = array<i32>} : memref<2x512xf32, #tpu.memory_space<vmem>>, vector<1x512xf32>,
    %c1 = arith.constant 1 : index
    %c0_22 = arith.constant 0 : index
    %34 = vector.load %arg8[%c1, %c0_22] : memref<2x512xf32, #tpu.memory_space<vmem>>, vector<1x512xf32>
    tpu.vector_store %arg8[%c1, %c0_22], %30 {strides = array<i32>} : memref<2x512xf32, #tpu.memory_space<vmem>>, vector<1x512xf32>,
    return
  }
  func.func @transform_0(%arg0: i32) -> (i32, i32) {
    %c0_i32 = arith.constant 0 : i32
    %c0_i32_0 = arith.constant 0 : i32
    return %c0_i32, %arg0 : i32, i32
  }
  func.func @transform_1(%arg0: i32) -> (i32, i32) {
    %c0_i32 = arith.constant 0 : i32
    %c0_i32_0 = arith.constant 0 : i32
    %c0_i32_1 = arith.constant 0 : i32
    return %c0_i32, %c0_i32_0 : i32, i32
  }
  func.func @transform_2(%arg0: i32) -> (i32, i32) {
    %c0_i32 = arith.constant 0 : i32
    %c0_i32_0 = arith.constant 0 : i32
    %c0_i32_1 = arith.constant 0 : i32
    return %c0_i32, %c0_i32_0 : i32, i32
  }
  func.func @transform_3(%arg0: i32) -> (i32, i32) {
    %c0_i32 = arith.constant 0 : i32
    %c0_i32_0 = arith.constant 0 : i32
    %c0_i32_1 = arith.constant 0 : i32
    return %c0_i32, %c0_i32_0 : i32, i32
  }
  func.func @transform_4(%arg0: i32) -> (i32, i32) {
    %c0_i32 = arith.constant 0 : i32
    %c0_i32_0 = arith.constant 0 : i32
    %c0_i32_1 = arith.constant 0 : i32
    return %c0_i32, %c0_i32_0 : i32, i32
  }
  func.func @transform_5(%arg0: i32) -> (i32, i32) {
    %c0_i32 = arith.constant 0 : i32
    %c0_i32_0 = arith.constant 0 : i32
    %c0_i32_1 = arith.constant 0 : i32
    return %c0_i32, %c0_i32_0 : i32, i32
  }
  func.func @transform_6(%arg0: i32) -> (i32, i32) {
    %c0_i32 = arith.constant 0 : i32
    %c0_i32_0 = arith.constant 0 : i32
    %c0_i32_1 = arith.constant 0 : i32
    return %c0_i32, %c0_i32_0 : i32, i32
  }
  func.func @transform_7(%arg0: i32) -> (i32, i32) {
    %c0_i32 = arith.constant 0 : i32
    %c0_i32_0 = arith.constant 0 : i32
    return %c0_i32, %arg0 : i32, i32
  }
}

</mosaic_0001>

<llo_original>
// kernel: tpu_custom_call.1
$region0: #{tpu_custom_call.1}
  #allocation0 [shape = 'u32[]', space=smem, size = 0x4, offset = 0x4, fixed_abs, tag = 'smem constant byte address 0x4 - core index']
  #allocation1 [shape = 'u32[144,128]{1,0:T(1,128)}', space=vmem, size = 0x12000, scoped, tag = 'internal scratch']
  #allocation2 [shape = 'f32[1,1]{1,0:T(1,128)S(1)}', space=vmem, size = 0x200, scoped, tag = 'scoped memory for tpu_custom_call.1']
  %s0 = inlined_call_operand.vmem [shape: f32[4,1024], index: 0, kind: input, shape index: {}]
  %s1 = inlined_call_operand.vmem [shape: bf16[16,4], index: 1, kind: input, shape index: {}]
  %s2 = inlined_call_operand.vmem [shape: f32[16,1], index: 2, kind: input, shape index: {}]
  %s3 = inlined_call_operand.vmem [shape: bf16[16,16], index: 3, kind: input, shape index: {}]
  %s4 = inlined_call_operand.vmem [shape: f32[16,1], index: 4, kind: input, shape index: {}]
  %s5 = inlined_call_operand.vmem [shape: bf16[1,16], index: 5, kind: input, shape index: {}]
  %s6 = inlined_call_operand.<no memory space> [shape: f32[1,1], index: 6, kind: input, shape index: {}]
  %s7 = inlined_call_operand.hbm [shape: f32[2,1024], index: 7, kind: output, shape index: {}]
  %s8 = sld [smem:[#allocation0]]
  $region61: #{tpu_custom_call.1} parent=0
    _
  %s10 = ssub.s32 1, %s8
  %s11 = scalar_select 0, %s10, %s8
  %v12 = vstv %s6
  %13 = vst [vmem:[#allocation2] sm:$0x1] %v12
  $region1: #{tpu_custom_call.1} parent=0
    #allocation3 [shape = 'u8[8192]{0}', space=vmem, size = 0x2000, scoped, tag = 'output window, operand 0']
    #allocation4 [shape = 's32[2]{0}', space=sflag, size = 0x8, scoped, tag = 'scoped memory for tpu_custom_call.1']
    %14 = vsyncpa [#allocation4], 0
    %s15 = scalar_lea.sflag [#allocation4], 1
    %16 = vsyncpa %s15, 0
    loop: start=0, step=1, limit=4
    $region2: #{tpu_custom_call.1} parent=1 // loop_pre_header
      _
    $region3: #{tpu_custom_call.1} parent=1 // loop_header
      %s18 = sphi 0, %s22
      %p19 = scmp.ge.s32.totalorder %s18, 4
      %s28 = sphi 0, %s30
      %s31 = sphi 0, %s28
      %s32 = sphi 0, %s31
      %s48 = sphi 0, %s32
      %s52 = sphi 0, %s52
      %s54 = sphi 0, %s52
      %s55 = sphi 0, %s54
      %s69 = sphi 0, %s55
      %s73 = sphi 0, %s73
      %s75 = sphi 0, %s73
      %s76 = sphi 0, %s75
      %s90 = sphi 0, %s76
      %s94 = sphi 0, %s94
      %s96 = sphi 0, %s94
      %s97 = sphi 0, %s96
      %s111 = sphi 0, %s97
      %s115 = sphi 0, %s115
      %s117 = sphi 0, %s115
      %s118 = sphi 0, %s117
      %s132 = sphi 0, %s118
      %s136 = sphi 0, %s136
      %s138 = sphi 0, %s136
      %s139 = sphi 0, %s138
      %s153 = sphi 0, %s139
      %s157 = sphi 0, %s157
      %s159 = sphi 0, %s157
      %s160 = sphi 0, %s159
      %s174 = sphi 0, %s160
      %s180 = sphi 0, %s182
      %s183 = sphi 0, %s180
      %s184 = sphi 0, %s183
      %s200 = sphi 0, %s184
    $region4: #{tpu_custom_call.1} parent=1 // loop_header_branch
      %21 = sbr.rel (%p19) target = $region8
    $region5: #{tpu_custom_call.1} parent=1 // loop_body
      %s23 = ssub.s32 %s18, 1
      %s24 = ssub.s32 %s18, 2
      %s25 = sadd.s32 %s18, 1
      %s26 = ssub.s32 %s18, %s25
      %p27 = scmp.eq.s32.totalorder %s26, 0
      %s29 = sadd.s32 %s28, 1
      %s30 = scalar_select %p27, %s28, %s29
      %p33 = pneg %p27
      %p34 = scmp.eq.s32.totalorder %s18, 1
      %p35 = por %p33, %p34
      %p36 = scmp.ne.s32.totalorder %s28, %s31
      %p37 = scmp.eq.s32.totalorder %s18, 0
      %p38 = por %p36, %p37
      %p39 = scmp.ne.s32.totalorder %s28, %s31
      %p40 = scmp.eq.s32.totalorder %s23, 1
      %p41 = por %p39, %p40
      %p42 = scmp.ne.s32.totalorder %s31, %s32
      %p43 = scmp.eq.s32.totalorder %s23, 0
      %p44 = por %p42, %p43
      %p45 = scmp.ne.s32.totalorder %s31, %s32
      %p46 = scmp.eq.s32.totalorder %s24, 1
      %p47 = por %p45, %p46
      %p49 = scmp.ne.s32.totalorder %s32, %s48
      %p50 = scmp.eq.s32.totalorder %s24, 0
      %p51 = por %p49, %p50
      %s53 = sadd.s32 %s52, 1
      %p56 = scmp.eq.s32.totalorder %s18, 1
      %p57 = scmp.ne.s32.totalorder %s52, %s54
      %p58 = scmp.eq.s32.totalorder %s18, 0
      %p59 = por %p57, %p58
      %p60 = scmp.ne.s32.totalorder %s52, %s54
      %p61 = scmp.eq.s32.totalorder %s23, 1
      %p62 = por %p60, %p61
      %p63 = scmp.ne.s32.totalorder %s54, %s55
      %p64 = scmp.eq.s32.totalorder %s23, 0
      %p65 = por %p63, %p64
      %p66 = scmp.ne.s32.totalorder %s54, %s55
      %p67 = scmp.eq.s32.totalorder %s24, 1
      %p68 = por %p66, %p67
      %p70 = scmp.ne.s32.totalorder %s55, %s69
      %p71 = scmp.eq.s32.totalorder %s24, 0
      %p72 = por %p70, %p71
      %s74 = sadd.s32 %s73, 1
      %p77 = scmp.eq.s32.totalorder %s18, 1
      %p78 = scmp.ne.s32.totalorder %s73, %s75
      %p79 = scmp.eq.s32.totalorder %s18, 0
      %p80 = por %p78, %p79
      %p81 = scmp.ne.s32.totalorder %s73, %s75
      %p82 = scmp.eq.s32.totalorder %s23, 1
      %p83 = por %p81, %p82
      %p84 = scmp.ne.s32.totalorder %s75, %s76
      %p85 = scmp.eq.s32.totalorder %s23, 0
      %p86 = por %p84, %p85
      %p87 = scmp.ne.s32.totalorder %s75, %s76
      %p88 = scmp.eq.s32.totalorder %s24, 1
      %p89 = por %p87, %p88
      %p91 = scmp.ne.s32.totalorder %s76, %s90
      %p92 = scmp.eq.s32.totalorder %s24, 0
      %p93 = por %p91, %p92
      %s95 = sadd.s32 %s94, 1
      %p98 = scmp.eq.s32.totalorder %s18, 1
      %p99 = scmp.ne.s32.totalorder %s94, %s96
      %p100 = scmp.eq.s32.totalorder %s18, 0
      %p101 = por %p99, %p100
      %p102 = scmp.ne.s32.totalorder %s94, %s96
      %p103 = scmp.eq.s32.totalorder %s23, 1
      %p104 = por %p102, %p103
      %p105 = scmp.ne.s32.totalorder %s96, %s97
      %p106 = scmp.eq.s32.totalorder %s23, 0
      %p107 = por %p105, %p106
      %p108 = scmp.ne.s32.totalorder %s96, %s97
      %p109 = scmp.eq.s32.totalorder %s24, 1
      %p110 = por %p108, %p109
      %p112 = scmp.ne.s32.totalorder %s97, %s111
      %p113 = scmp.eq.s32.totalorder %s24, 0
      %p114 = por %p112, %p113
      %s116 = sadd.s32 %s115, 1
      %p119 = scmp.eq.s32.totalorder %s18, 1
      %p120 = scmp.ne.s32.totalorder %s115, %s117
      %p121 = scmp.eq.s32.totalorder %s18, 0
      %p122 = por %p120, %p121
      %p123 = scmp.ne.s32.totalorder %s115, %s117
      %p124 = scmp.eq.s32.totalorder %s23, 1
      %p125 = por %p123, %p124
      %p126 = scmp.ne.s32.totalorder %s117, %s118
      %p127 = scmp.eq.s32.totalorder %s23, 0
      %p128 = por %p126, %p127
      %p129 = scmp.ne.s32.totalorder %s117, %s118
      %p130 = scmp.eq.s32.totalorder %s24, 1
      %p131 = por %p129, %p130
      %p133 = scmp.ne.s32.totalorder %s118, %s132
      %p134 = scmp.eq.s32.totalorder %s24, 0
      %p135 = por %p133, %p134
      %s137 = sadd.s32 %s136, 1
      %p140 = scmp.eq.s32.totalorder %s18, 1
      %p141 = scmp.ne.s32.totalorder %s136, %s138
      %p142 = scmp.eq.s32.totalorder %s18, 0
      %p143 = por %p141, %p142
      %p144 = scmp.ne.s32.totalorder %s136, %s138
      %p145 = scmp.eq.s32.totalorder %s23, 1
      %p146 = por %p144, %p145
      %p147 = scmp.ne.s32.totalorder %s138, %s139
      %p148 = scmp.eq.s32.totalorder %s23, 0
      %p149 = por %p147, %p148
      %p150 = scmp.ne.s32.totalorder %s138, %s139
      %p151 = scmp.eq.s32.totalorder %s24, 1
      %p152 = por %p150, %p151
      %p154 = scmp.ne.s32.totalorder %s139, %s153
      %p155 = scmp.eq.s32.totalorder %s24, 0
      %p156 = por %p154, %p155
      %s158 = sadd.s32 %s157, 1
      %p161 = scmp.eq.s32.totalorder %s18, 1
      %p162 = scmp.ne.s32.totalorder %s157, %s159
      %p163 = scmp.eq.s32.totalorder %s18, 0
      %p164 = por %p162, %p163
      %p165 = scmp.ne.s32.totalorder %s157, %s159
      %p166 = scmp.eq.s32.totalorder %s23, 1
      %p167 = por %p165, %p166
      %p168 = scmp.ne.s32.totalorder %s159, %s160
      %p169 = scmp.eq.s32.totalorder %s23, 0
      %p170 = por %p168, %p169
      %p171 = scmp.ne.s32.totalorder %s159, %s160
      %p172 = scmp.eq.s32.totalorder %s24, 1
      %p173 = por %p171, %p172
      %p175 = scmp.ne.s32.totalorder %s160, %s174
      %p176 = scmp.eq.s32.totalorder %s24, 0
      %p177 = por %p175, %p176
      %s178 = ssub.s32 %s18, %s25
      %p179 = scmp.eq.s32.totalorder %s178, 0
      %s181 = sadd.s32 %s180, 1
      %s182 = scalar_select %p179, %s180, %s181
      %p185 = pneg %p179
      %p186 = scmp.eq.s32.totalorder %s18, 1
      %p187 = por %p185, %p186
      %p188 = scmp.ne.s32.totalorder %s180, %s183
      %p189 = scmp.eq.s32.totalorder %s18, 0
      %p190 = por %p188, %p189
      %p191 = scmp.ne.s32.totalorder %s180, %s183
      %p192 = scmp.eq.s32.totalorder %s23, 1
      %p193 = por %p191, %p192
      %p194 = scmp.ne.s32.totalorder %s183, %s184
      %p195 = scmp.eq.s32.totalorder %s23, 0
      %p196 = por %p194, %p195
      %p197 = scmp.ne.s32.totalorder %s183, %s184
      %p198 = scmp.eq.s32.totalorder %s24, 1
      %p199 = por %p197, %p198
      %p201 = scmp.ne.s32.totalorder %s184, %s200
      %p202 = scmp.eq.s32.totalorder %s24, 0
      %p203 = por %p201, %p202
      %p204 = scmp.le.s32.totalorder 1, %s18
      %p205 = scmp.lt.s32.totalorder %s18, 3
      %p206 = pnand %p204, %p205
      %p207 = pneg %p206
      // Predicated region
      $region9: #{tpu_custom_call.1} parent=5 // pred_check
        _
      $region10: #{tpu_custom_call.1} parent=5 // pred_check_branch
        %209 = sbr.rel (%p206) target = $region12
      $region11: #{tpu_custom_call.1} parent=5 // pred_region
        %s210 = ssub.s32 %s18, 1
        // Predicated region
        $region13: #{tpu_custom_call.1} parent=11 // pred_check
          %p211 = pneg %p65
        $region14: #{tpu_custom_call.1} parent=11 // pred_check_branch
          %213 = sbr.rel (%p211) target = $region16
        $region15: #{tpu_custom_call.1} parent=11 // pred_region
          _
        $region16: #{tpu_custom_call.1} parent=11 // pred_fallthru
          _
        // Predicated region
        $region17: #{tpu_custom_call.1} parent=11 // pred_check
          %p214 = pneg %p86
        $region18: #{tpu_custom_call.1} parent=11 // pred_check_branch
          %216 = sbr.rel (%p214) target = $region20
        $region19: #{tpu_custom_call.1} parent=11 // pred_region
          _
        $region20: #{tpu_custom_call.1} parent=11 // pred_fallthru
          _
        // Predicated region
        $region21: #{tpu_custom_call.1} parent=11 // pred_check
          %p217 = pneg %p107
        $region22: #{tpu_custom_call.1} parent=11 // pred_check_branch
          %219 = sbr.rel (%p217) target = $region24
        $region23: #{tpu_custom_call.1} parent=11 // pred_region
          _
        $region24: #{tpu_custom_call.1} parent=11 // pred_fallthru
          _
        // Predicated region
        $region25: #{tpu_custom_call.1} parent=11 // pred_check
          %p220 = pneg %p128
        $region26: #{tpu_custom_call.1} parent=11 // pred_check_branch
          %222 = sbr.rel (%p220) target = $region28
        $region27: #{tpu_custom_call.1} parent=11 // pred_region
          _
        $region28: #{tpu_custom_call.1} parent=11 // pred_fallthru
          _
        // Predicated region
        $region29: #{tpu_custom_call.1} parent=11 // pred_check
          %p223 = pneg %p149
        $region30: #{tpu_custom_call.1} parent=11 // pred_check_branch
          %225 = sbr.rel (%p223) target = $region32
        $region31: #{tpu_custom_call.1} parent=11 // pred_region
          _
        $region32: #{tpu_custom_call.1} parent=11 // pred_fallthru
          _
        // Predicated region
        $region33: #{tpu_custom_call.1} parent=11 // pred_check
          %p226 = pneg %p170
        $region34: #{tpu_custom_call.1} parent=11 // pred_check_branch
          %228 = sbr.rel (%p226) target = $region36
        $region35: #{tpu_custom_call.1} parent=11 // pred_region
          _
        $region36: #{tpu_custom_call.1} parent=11 // pred_fallthru
          _
      $region12: #{tpu_custom_call.1} parent=5 // pred_fallthru
        _
      %p229 = scmp.lt.s32.totalorder %s18, 2
      // Predicated region
      $region37: #{tpu_custom_call.1} parent=5 // pred_check
        %p230 = pneg %p229
      $region38: #{tpu_custom_call.1} parent=5 // pred_check_branch
        %232 = sbr.rel (%p230) target = $region40
      $region39: #{tpu_custom_call.1} parent=5 // pred_region
        // Predicated region
        $region41: #{tpu_custom_call.1} parent=39 // pred_check
          %p233 = pneg %p38
        $region42: #{tpu_custom_call.1} parent=39 // pred_check_branch
          %235 = sbr.rel (%p233) target = $region44
        $region43: #{tpu_custom_call.1} parent=39 // pred_region
          %s236 = smul.u32 4, %s18
          %p237 = scmp.lt.s32.totalorder %s236, 7
          %s238 = scalar_select %p237, %s236, 7
          %s239 = smul.addr %s238, 4
          %s240 = scalar_lea.vmem %s0, %s239
          %s241 = smul.u32 4, %s18
        $region44: #{tpu_custom_call.1} parent=39 // pred_fallthru
          _
      $region40: #{tpu_custom_call.1} parent=5 // pred_fallthru
        _
      %p242 = scmp.le.s32.totalorder 1, %s18
      %p243 = scmp.lt.s32.totalorder %s18, 3
      %p244 = pnand %p242, %p243
      %p245 = pneg %p244
      // Predicated region
      $region45: #{tpu_custom_call.1} parent=5 // pred_check
        _
      $region46: #{tpu_custom_call.1} parent=5 // pred_check_branch
        %247 = sbr.rel (%p244) target = $region48
      $region47: #{tpu_custom_call.1} parent=5 // pred_region
        %s248 = ssub.s32 %s18, 1
        %s249 = smul.u32 4, %s23
        %p250 = scmp.lt.s32.totalorder %s249, 7
        %s251 = scalar_select %p250, %s249, 7
        %s252 = smul.addr %s251, 4
        %s253 = scalar_lea.vmem %s0, %s252
        %p254 = pneg %p44
        %p255 = pneg %p41
        %p256 = pneg %p65
        %p257 = pneg %p62
        %p258 = pneg %p86
        %p259 = pneg %p83
        %p260 = pneg %p107
        %p261 = pneg %p104
        %p262 = pneg %p128
        %p263 = pneg %p125
        %p264 = pneg %p149
        %p265 = pneg %p146
        %p266 = pneg %p170
        %p267 = pneg %p167
        %p268 = pneg %p196
        %p269 = pneg %p193
        %s270 = sand.u32 %s183, 1
        %s271 = scalar_lea.sflag [#allocation4], %s270
        %s272 = sand.u32 %s183, 1
        %s273 = smul.addr %s272, 8
        %s274 = scalar_lea.vmem [#allocation3], %s273
        %s275 = smul.u32 4, %s23
        %p276 = scmp.lt.s32.totalorder %s275, 7
        %s277 = scalar_select %p276, %s275, 7
        %s278 = smul.addr %s277, 4
        %s279 = scalar_lea.vmem %s0, %s278
        %s280 = smul.u32 4, %s23
        %s281 = smul.u32 4, %s23
        %v283 = vld [vmem:[%s279] sm:$0xff]
        %v284 = vld [vmem:[%s279 + $0x8] sm:$0xff]
        %v287 = vcombine.high %v283, %v283
        %v288 = vcombine.high %v284, %v284
        %v291 = vpack.c.bf16 %v283, %v283
        %v292 = vpack.c.bf16 %v287, %v287
        %v293 = vpack.c.bf16 %v284, %v284
        %v294 = vpack.c.bf16 %v288, %v288
        %v295 = vld [vmem:[%s1] sm:$0xf]
        %v296 = vld [vmem:[%s1 + $0x4] sm:$0xf]
        %v297 = vld [vmem:[%s2] sm:$0xff]
        %v298 = vld [vmem:[%s2 + $0x8] sm:$0xff]
        %300 = vset.pattern.permute.xlu0 0
        %301 = vperm.xlu0 %300, %v297
        %v302 = vpop.permute.xlu0 %301
        %305 = vset.pattern.permute.xlu0 0
        %306 = vperm.xlu0 %305, %v298
        %v307 = vpop.permute.xlu0 %306
        %v311 = vunpack.c.l.b16 %v295
        %v312 = vunpack.c.l.b16 %v296
        %v313 = vpack.c.b16 %v312, %v311
        %vm314 = vcmask 31744
        %v316 = vsel %vm314, %v313, 0
        %vm318 = vcmask 1041408
        %v320 = vsel %vm318, %v291, 0
        %v323 = vsel %vm318, %v292, 0
        %v326 = vsel %vm318, %v293, 0
        %v329 = vsel %vm318, %v294, 0
        %331 = vmatprep.subr.bf16.mxu0 0
        %332 = vmatpush1.bf16.msra.mxu0 0
        %333 = vmatprep.subr.bf16.mxu0 0
        %334 = vmatpush1.bf16.msra.mxu0 0
        %335 = vmatprep.subr.bf16.mxu0 0
        %336 = vmatpush1.bf16.msra.mxu0 0
        %337 = vmatprep.subr.bf16.mxu0 0
        %338 = vmatpush1.bf16.msra.mxu0 0
        %339 = vmatprep.subr.bf16.mxu0 0
        %340 = vmatpush1.bf16.msra.mxu0 0
        %341 = vmatprep.subr.bf16.mxu0 0
        %342 = vmatpush1.bf16.msra.mxu0 0
        %343 = vmatprep.subr.bf16.mxu0 0
        %344 = vmatpush1.bf16.msra.mxu0 0
        %345 = vmatprep.subr.bf16.mxu0 %v323
        %346 = vmatpush1.bf16.msra.mxu0 %v320
        %347 = vmatprep.subr.bf16.mxu0 0
        %348 = vmatpush2.bf16.msra.mxu0 0
        %349 = vmatprep.subr.bf16.mxu0 0
        %350 = vmatpush2.bf16.msra.mxu0 0
        %351 = vmatprep.subr.bf16.mxu0 0
        %352 = vmatpush2.bf16.msra.mxu0 0
        %353 = vmatprep.subr.bf16.mxu0 0
        %354 = vmatpush2.bf16.msra.mxu0 0
        %355 = vmatprep.subr.bf16.mxu0 0
        %356 = vmatpush2.bf16.msra.mxu0 0
        %357 = vmatprep.subr.bf16.mxu0 0
        %358 = vmatpush2.bf16.msra.mxu0 0
        %359 = vmatprep.subr.bf16.mxu0 0
        %360 = vmatpush2.bf16.msra.mxu0 0
        %361 = vmatprep.subr.bf16.mxu0 0
        %362 = vmatpush2.bf16.msra.mxu0 0
        %363 = vmatprep.mubr.bf16.mxu0 0
        %364 = vmatmul.mubr.bf16.gmra.mxu0 %v316
        %v365 = vpop.f32.mrf.mxu0
        %v366 = vadd.f32 %v302, %v365
        %v367 = vpop.f32.mrf.mxu0
        %v368 = vadd.f32 %v302, %v367
        %v369 = vpop.f32.mrf.mxu0
        %v370 = vadd.f32 %v307, %v369
        %v371 = vpop.f32.mrf.mxu0
        %v372 = vadd.f32 %v307, %v371
        %373 = vdwg.mxu0
        %374 = vmatprep.subr.bf16.mxu0 0
        %375 = vmatpush1.bf16.msra.mxu0 0
        %376 = vmatprep.subr.bf16.mxu0 0
        %377 = vmatpush1.bf16.msra.mxu0 0
        %378 = vmatprep.subr.bf16.mxu0 0
        %379 = vmatpush1.bf16.msra.mxu0 0
        %380 = vmatprep.subr.bf16.mxu0 0
        %381 = vmatpush1.bf16.msra.mxu0 0
        %382 = vmatprep.subr.bf16.mxu0 0
        %383 = vmatpush1.bf16.msra.mxu0 0
        %384 = vmatprep.subr.bf16.mxu0 0
        %385 = vmatpush1.bf16.msra.mxu0 0
        %386 = vmatprep.subr.bf16.mxu0 0
        %387 = vmatpush1.bf16.msra.mxu0 0
        %388 = vmatprep.subr.bf16.mxu0 %v329
        %389 = vmatpush1.bf16.msra.mxu0 %v326
        %390 = vmatprep.subr.bf16.mxu0 0
        %391 = vmatpush2.bf16.msra.mxu0 0
        %392 = vmatprep.subr.bf16.mxu0 0
        %393 = vmatpush2.bf16.msra.mxu0 0
        %394 = vmatprep.subr.bf16.mxu0 0
        %395 = vmatpush2.bf16.msra.mxu0 0
        %396 = vmatprep.subr.bf16.mxu0 0
        %397 = vmatpush2.bf16.msra.mxu0 0
        %398 = vmatprep.subr.bf16.mxu0 0
        %399 = vmatpush2.bf16.msra.mxu0 0
        %400 = vmatprep.subr.bf16.mxu0 0
        %401 = vmatpush2.bf16.msra.mxu0 0
        %402 = vmatprep.subr.bf16.mxu0 0
        %403 = vmatpush2.bf16.msra.mxu0 0
        %404 = vmatprep.subr.bf16.mxu0 0
        %405 = vmatpush2.bf16.msra.mxu0 0
        %406 = vmatprep.mubr.bf16.mxu0 0
        %407 = vmatmul.mubr.bf16.gmra.mxu0 %v316
        %v408 = vpop.f32.mrf.mxu0
        %v409 = vadd.f32 %v302, %v408
        %v410 = vpop.f32.mrf.mxu0
        %v411 = vadd.f32 %v302, %v410
        %v412 = vpop.f32.mrf.mxu0
        %v413 = vadd.f32 %v307, %v412
        %v414 = vpop.f32.mrf.mxu0
        %v415 = vadd.f32 %v307, %v414
        %416 = vdwg.mxu0
        %v417 = vtanh.pop %v366
        %v418 = vtanh.pop %v368
        %v419 = vtanh.pop %v409
        %v420 = vtanh.pop %v411
        %v421 = vtanh.pop %v370
        %v422 = vtanh.pop %v372
        %v423 = vtanh.pop %v413
        %v424 = vtanh.pop %v415
        %v425 = vld [vmem:[%s3] sm:$0xf]
        %v426 = vld [vmem:[%s3 + $0x4] sm:$0xf]
        %v427 = vpack.c.bf16 %v421, %v417
        %v428 = vpack.c.bf16 %v422, %v418
        %v429 = vpack.c.bf16 %v423, %v419
        %v430 = vpack.c.bf16 %v424, %v420
        %v431 = vld [vmem:[%s4] sm:$0xff]
        %v432 = vld [vmem:[%s4 + $0x8] sm:$0xff]
        %434 = vset.pattern.permute.xlu0 0
        %435 = vperm.xlu0 %434, %v431
        %v436 = vpop.permute.xlu0 %435
        %439 = vset.pattern.permute.xlu0 0
        %440 = vperm.xlu0 %439, %v432
        %v441 = vpop.permute.xlu0 %440
        %v445 = vunpack.c.l.b16 %v425
        %v446 = vunpack.c.l.b16 %v426
        %v447 = vpack.c.b16 %v446, %v445
        %vm448 = vcmask 130048
        %v450 = vsel %vm448, %v447, 0
        %452 = vmatprep.subr.bf16.mxu0 0
        %453 = vmatpush1.bf16.msra.mxu0 0
        %454 = vmatprep.subr.bf16.mxu0 0
        %455 = vmatpush1.bf16.msra.mxu0 0
        %456 = vmatprep.subr.bf16.mxu0 0
        %457 = vmatpush1.bf16.msra.mxu0 0
        %458 = vmatprep.subr.bf16.mxu0 0
        %459 = vmatpush1.bf16.msra.mxu0 0
        %460 = vmatprep.subr.bf16.mxu0 0
        %461 = vmatpush1.bf16.msra.mxu0 0
        %462 = vmatprep.subr.bf16.mxu0 0
        %463 = vmatpush1.bf16.msra.mxu0 0
        %464 = vmatprep.subr.bf16.mxu0 0
        %465 = vmatpush1.bf16.msra.mxu0 0
        %466 = vmatprep.subr.bf16.mxu0 %v428
        %467 = vmatpush1.bf16.msra.mxu0 %v427
        %468 = vmatprep.subr.bf16.mxu0 0
        %469 = vmatpush2.bf16.msra.mxu0 0
        %470 = vmatprep.subr.bf16.mxu0 0
        %471 = vmatpush2.bf16.msra.mxu0 0
        %472 = vmatprep.subr.bf16.mxu0 0
        %473 = vmatpush2.bf16.msra.mxu0 0
        %474 = vmatprep.subr.bf16.mxu0 0
        %475 = vmatpush2.bf16.msra.mxu0 0
        %476 = vmatprep.subr.bf16.mxu0 0
        %477 = vmatpush2.bf16.msra.mxu0 0
        %478 = vmatprep.subr.bf16.mxu0 0
        %479 = vmatpush2.bf16.msra.mxu0 0
        %480 = vmatprep.subr.bf16.mxu0 0
        %481 = vmatpush2.bf16.msra.mxu0 0
        %482 = vmatprep.subr.bf16.mxu0 0
        %483 = vmatpush2.bf16.msra.mxu0 0
        %484 = vmatprep.mubr.bf16.mxu0 0
        %485 = vmatmul.mubr.bf16.gmra.mxu0 %v450
        %v486 = vpop.f32.mrf.mxu0
        %v487 = vadd.f32 %v436, %v486
        %v488 = vpop.f32.mrf.mxu0
        %v489 = vadd.f32 %v436, %v488
        %v490 = vpop.f32.mrf.mxu0
        %v491 = vadd.f32 %v441, %v490
        %v492 = vpop.f32.mrf.mxu0
        %v493 = vadd.f32 %v441, %v492
        %494 = vdwg.mxu0
        %495 = vmatprep.subr.bf16.mxu0 0
        %496 = vmatpush1.bf16.msra.mxu0 0
        %497 = vmatprep.subr.bf16.mxu0 0
        %498 = vmatpush1.bf16.msra.mxu0 0
        %499 = vmatprep.subr.bf16.mxu0 0
        %500 = vmatpush1.bf16.msra.mxu0 0
        %501 = vmatprep.subr.bf16.mxu0 0
        %502 = vmatpush1.bf16.msra.mxu0 0
        %503 = vmatprep.subr.bf16.mxu0 0
        %504 = vmatpush1.bf16.msra.mxu0 0
        %505 = vmatprep.subr.bf16.mxu0 0
        %506 = vmatpush1.bf16.msra.mxu0 0
        %507 = vmatprep.subr.bf16.mxu0 0
        %508 = vmatpush1.bf16.msra.mxu0 0
        %509 = vmatprep.subr.bf16.mxu0 %v430
        %510 = vmatpush1.bf16.msra.mxu0 %v429
        %511 = vmatprep.subr.bf16.mxu0 0
        %512 = vmatpush2.bf16.msra.mxu0 0
        %513 = vmatprep.subr.bf16.mxu0 0
        %514 = vmatpush2.bf16.msra.mxu0 0
        %515 = vmatprep.subr.bf16.mxu0 0
        %516 = vmatpush2.bf16.msra.mxu0 0
        %517 = vmatprep.subr.bf16.mxu0 0
        %518 = vmatpush2.bf16.msra.mxu0 0
        %519 = vmatprep.subr.bf16.mxu0 0
        %520 = vmatpush2.bf16.msra.mxu0 0
        %521 = vmatprep.subr.bf16.mxu0 0
        %522 = vmatpush2.bf16.msra.mxu0 0
        %523 = vmatprep.subr.bf16.mxu0 0
        %524 = vmatpush2.bf16.msra.mxu0 0
        %525 = vmatprep.subr.bf16.mxu0 0
        %526 = vmatpush2.bf16.msra.mxu0 0
        %527 = vmatprep.mubr.bf16.mxu0 0
        %528 = vmatmul.mubr.bf16.gmra.mxu0 %v450
        %v529 = vpop.f32.mrf.mxu0
        %v530 = vadd.f32 %v436, %v529
        %v531 = vpop.f32.mrf.mxu0
        %v532 = vadd.f32 %v436, %v531
        %v533 = vpop.f32.mrf.mxu0
        %v534 = vadd.f32 %v441, %v533
        %v535 = vpop.f32.mrf.mxu0
        %v536 = vadd.f32 %v441, %v535
        %537 = vdwg.mxu0
        %v538 = vtanh.pop %v487
        %v539 = vtanh.pop %v489
        %v540 = vtanh.pop %v530
        %v541 = vtanh.pop %v532
        %v542 = vtanh.pop %v491
        %v543 = vtanh.pop %v493
        %v544 = vtanh.pop %v534
        %v545 = vtanh.pop %v536
        %v546 = vld [vmem:[%s5] sm:$0x1]
        %v547 = vpack.c.bf16 %v542, %v538
        %v548 = vpack.c.bf16 %v543, %v539
        %v549 = vpack.c.bf16 %v544, %v540
        %v550 = vpack.c.bf16 %v545, %v541
        %v551 = vld [vmem:[#allocation2] sm:$0x1]
        %553 = vset.pattern.permute.xlu0 0
        %554 = vperm.xlu0 %553, %v551
        %v555 = vpop.permute.xlu0 %554
        %v557 = vlaneseq
        %v558 = vshrl.u32 %v557, 7
        %v559 = vsub.s32 0, %v558
        %v560 = vrot.slane %v555, %v559
        %v562 = vsel %vm448, %v546, 0
        %564 = vmatprep.subr.bf16.mxu0 0
        %565 = vmatpush1.bf16.msra.mxu0 0
        %566 = vmatprep.subr.bf16.mxu0 0
        %567 = vmatpush1.bf16.msra.mxu0 0
        %568 = vmatprep.subr.bf16.mxu0 0
        %569 = vmatpush1.bf16.msra.mxu0 0
        %570 = vmatprep.subr.bf16.mxu0 0
        %571 = vmatpush1.bf16.msra.mxu0 0
        %572 = vmatprep.subr.bf16.mxu0 0
        %573 = vmatpush1.bf16.msra.mxu0 0
        %574 = vmatprep.subr.bf16.mxu0 0
        %575 = vmatpush1.bf16.msra.mxu0 0
        %576 = vmatprep.subr.bf16.mxu0 0
        %577 = vmatpush1.bf16.msra.mxu0 0
        %578 = vmatprep.subr.bf16.mxu0 %v548
        %579 = vmatpush1.bf16.msra.mxu0 %v547
        %580 = vmatprep.subr.bf16.mxu0 0
        %581 = vmatpush2.bf16.msra.mxu0 0
        %582 = vmatprep.subr.bf16.mxu0 0
        %583 = vmatpush2.bf16.msra.mxu0 0
        %584 = vmatprep.subr.bf16.mxu0 0
        %585 = vmatpush2.bf16.msra.mxu0 0
        %586 = vmatprep.subr.bf16.mxu0 0
        %587 = vmatpush2.bf16.msra.mxu0 0
        %588 = vmatprep.subr.bf16.mxu0 0
        %589 = vmatpush2.bf16.msra.mxu0 0
        %590 = vmatprep.subr.bf16.mxu0 0
        %591 = vmatpush2.bf16.msra.mxu0 0
        %592 = vmatprep.subr.bf16.mxu0 0
        %593 = vmatpush2.bf16.msra.mxu0 0
        %594 = vmatprep.subr.bf16.mxu0 0
        %595 = vmatpush2.bf16.msra.mxu0 0
        %596 = vmatprep.mubr.bf16.mxu0 0
        %597 = vmatmul.mubr.bf16.gmra.mxu0 %v562
        %v598 = vpop.f32.mrf.mxu0
        %v599 = vadd.f32 %v560, %v598
        %v600 = vpop.f32.mrf.mxu0
        %v601 = vadd.f32 %v560, %v600
        %v602 = vpop.f32.mrf.mxu0
        %v603 = vpop.f32.mrf.mxu0
        %604 = vdwg.mxu0
        %605 = vmatprep.subr.bf16.mxu0 0
        %606 = vmatpush1.bf16.msra.mxu0 0
        %607 = vmatprep.subr.bf16.mxu0 0
        %608 = vmatpush1.bf16.msra.mxu0 0
        %609 = vmatprep.subr.bf16.mxu0 0
        %610 = vmatpush1.bf16.msra.mxu0 0
        %611 = vmatprep.subr.bf16.mxu0 0
        %612 = vmatpush1.bf16.msra.mxu0 0
        %613 = vmatprep.subr.bf16.mxu0 0
        %614 = vmatpush1.bf16.msra.mxu0 0
        %615 = vmatprep.subr.bf16.mxu0 0
        %616 = vmatpush1.bf16.msra.mxu0 0
        %617 = vmatprep.subr.bf16.mxu0 0
        %618 = vmatpush1.bf16.msra.mxu0 0
        %619 = vmatprep.subr.bf16.mxu0 %v550
        %620 = vmatpush1.bf16.msra.mxu0 %v549
        %621 = vmatprep.subr.bf16.mxu0 0
        %622 = vmatpush2.bf16.msra.mxu0 0
        %623 = vmatprep.subr.bf16.mxu0 0
        %624 = vmatpush2.bf16.msra.mxu0 0
        %625 = vmatprep.subr.bf16.mxu0 0
        %626 = vmatpush2.bf16.msra.mxu0 0
        %627 = vmatprep.subr.bf16.mxu0 0
        %628 = vmatpush2.bf16.msra.mxu0 0
        %629 = vmatprep.subr.bf16.mxu0 0
        %630 = vmatpush2.bf16.msra.mxu0 0
        %631 = vmatprep.subr.bf16.mxu0 0
        %632 = vmatpush2.bf16.msra.mxu0 0
        %633 = vmatprep.subr.bf16.mxu0 0
        %634 = vmatpush2.bf16.msra.mxu0 0
        %635 = vmatprep.subr.bf16.mxu0 0
        %636 = vmatpush2.bf16.msra.mxu0 0
        %637 = vmatprep.mubr.bf16.mxu0 0
        %638 = vmatmul.mubr.bf16.gmra.mxu0 %v562
        %v639 = vpop.f32.mrf.mxu0
        %v640 = vadd.f32 %v560, %v639
        %v641 = vpop.f32.mrf.mxu0
        %v642 = vadd.f32 %v560, %v641
        %v643 = vpop.f32.mrf.mxu0
        %v644 = vpop.f32.mrf.mxu0
        %645 = vdwg.mxu0
        %v646 = vmax.f32 %v599, -30.0
        %v647 = vmax.f32 %v601, -30.0
        %v648 = vmax.f32 %v640, -30.0
        %v649 = vmax.f32 %v642, -30.0
        %v650 = vmin.f32 %v646, 30.0
        %v651 = vmin.f32 %v647, 30.0
        %v652 = vmin.f32 %v648, 30.0
        %v653 = vmin.f32 %v649, 30.0
        %v654 = vsub.f32 0.0, %v650
        %v655 = vsub.f32 0.0, %v651
        %v656 = vsub.f32 0.0, %v652
        %v657 = vsub.f32 0.0, %v653
        %v658 = vmul.f32 %v654, 1.442695
        %v659 = vpow.pop %v658
        %v660 = vmul.f32 %v655, 1.442695
        %v661 = vpow.pop %v660
        %v662 = vmul.f32 %v656, 1.442695
        %v663 = vpow.pop %v662
        %v664 = vmul.f32 %v657, 1.442695
        %v665 = vpow.pop %v664
        %v666 = vadd.f32 %v659, 1.0
        %v667 = vadd.f32 %v661, 1.0
        %v668 = vadd.f32 %v663, 1.0
        %v669 = vadd.f32 %v665, 1.0
        %v670 = vrcp.pop %v666
        %v671 = vrcp.pop %v667
        %v672 = vrcp.pop %v668
        %v673 = vrcp.pop %v669
        %v674 = vsub.f32 1.0, %v670
        %v675 = vsub.f32 1.0, %v671
        %v676 = vsub.f32 1.0, %v672
        %v677 = vsub.f32 1.0, %v673
        %v682 = vcombine.low %v674, %v675
        %v683 = vcombine.low %v676, %v677
        %v685 = vunpack.c.l.s4 1966171168
        %v686 = vunpack.c.0.s8 %v685
        %v687 = vlaneseq
        %v688 = vshrl.u32 %v687, 7
        %v689 = vsub.s32 %v686, %v688
        %v690 = vrot.slane %v682, %v689
        %v692 = vunpack.c.l.s4 1966171168
        %v693 = vunpack.c.0.s8 %v692
        %v694 = vlaneseq
        %v695 = vshrl.u32 %v694, 7
        %v696 = vsub.s32 %v693, %v695
        %v697 = vrot.slane %v683, %v696
        %v698 = vcombine.low %v690, %v697
        %v700 = vunpack.c.l.s4 1966171168
        %v701 = vunpack.c.0.s8 %v700
        %v702 = vlaneseq
        %v703 = vshrl.u32 %v702, 7
        %v704 = vsub.s32 %v701, %v703
        %v705 = vrot.slane %v698, %v704
        %v707 = vlaneseq
        %vm708 = vcmp.ge.s32.totalorder %v707, 0
        %vm709 = vcmp.lt.s32.totalorder %v707, 512
        %vm710 = vmand %vm708, %vm709
        %711 = vst.msk [vmem:[%s274] ss:$2 sm:$0xf] %vm710, %v705
        %v716 = vcombine.low %v670, %v671
        %v717 = vcombine.low %v672, %v673
        %v719 = vunpack.c.l.s4 1966171168
        %v720 = vunpack.c.0.s8 %v719
        %v721 = vlaneseq
        %v722 = vshrl.u32 %v721, 7
        %v723 = vsub.s32 %v720, %v722
        %v724 = vrot.slane %v716, %v723
        %v726 = vunpack.c.l.s4 1966171168
        %v727 = vunpack.c.0.s8 %v726
        %v728 = vlaneseq
        %v729 = vshrl.u32 %v728, 7
        %v730 = vsub.s32 %v727, %v729
        %v731 = vrot.slane %v717, %v730
        %v732 = vcombine.low %v724, %v731
        %v734 = vunpack.c.l.s4 1966171168
        %v735 = vunpack.c.0.s8 %v734
        %v736 = vlaneseq
        %v737 = vshrl.u32 %v736, 7
        %v738 = vsub.s32 %v735, %v737
        %v739 = vrot.slane %v732, %v738
        %s741 = scalar_lea.vmem %s274, 1 [#allocation3]
        %742 = vst.msk [vmem:[%s741] ss:$2 sm:$0xf] %vm710, %v739
        %s743 = sand.u32 %s183, 1
        %s744 = scalar_lea.sflag [#allocation4], %s743
        %s745 = sand.u32 %s183, 1
        %s746 = smul.addr %s745, 8
        %s747 = scalar_lea.vmem [#allocation3], %s746
        // Predicated region
        $region49: #{tpu_custom_call.1} parent=47 // pred_check
          %p748 = pneg %p193
        $region50: #{tpu_custom_call.1} parent=47 // pred_check_branch
          %750 = sbr.rel (%p748) target = $region52
        $region51: #{tpu_custom_call.1} parent=47 // pred_region
          %s751 = smul.u32 4, %s23
          %s753 = ssub.s32 128, 128
          %754 = vsyncadd %s744, %s753
          %s755 = smul.addr %s751, 32
          %s756 = scalar_lea.hbm %s7, %s755
          %s758 = sshll.u32 %s747, 4
          %s759 = int_to_ptr.vmem [resolvable:$true] %s758
          %761 = dma.vmem_to_hbm [thread:$0]  %s759, 128, %s756, %s744
        $region52: #{tpu_custom_call.1} parent=47 // pred_fallthru
          _
      $region48: #{tpu_custom_call.1} parent=5 // pred_fallthru
        _
      %p762 = scmp.le.s32.totalorder 2, %s18
      // Predicated region
      $region53: #{tpu_custom_call.1} parent=5 // pred_check
        %p763 = pneg %p762
      $region54: #{tpu_custom_call.1} parent=5 // pred_check_branch
        %765 = sbr.rel (%p763) target = $region56
      $region55: #{tpu_custom_call.1} parent=5 // pred_region
        %s766 = ssub.s32 %s18, 2
        // Predicated region
        $region57: #{tpu_custom_call.1} parent=55 // pred_check
          %p767 = pneg %p199
        $region58: #{tpu_custom_call.1} parent=55 // pred_check_branch
          %769 = sbr.rel (%p767) target = $region60
        $region59: #{tpu_custom_call.1} parent=55 // pred_region
          %s770 = sand.u32 %s184, 1
          %s771 = scalar_lea.sflag [#allocation4], %s770
          %s772 = sand.u32 %s184, 1
          %s773 = smul.addr %s772, 8
          %s774 = scalar_lea.vmem [#allocation3], %s773
          %775 = dma.done %s771, 128
        $region60: #{tpu_custom_call.1} parent=55 // pred_fallthru
          _
      $region56: #{tpu_custom_call.1} parent=5 // pred_fallthru
        _
    $region6: #{tpu_custom_call.1} parent=1 // loop_footer
      %s22 = sadd.s32 1, %s18
    $region7: #{tpu_custom_call.1} parent=1 // loop_footer_branch
      %17 = sbr.rel target = $region3
    $region8: #{tpu_custom_call.1} parent=1 // loop_exit
      _
    %776 = vsyncpa [#allocation4], 1
    %s777 = scalar_lea.sflag [#allocation4], 1
    %778 = vsyncpa %s777, 1

</llo_original>
